<compile_context>
chip_gen: v7x
topology: tpu7x:2x2x1
jax: 0.10.0
libtpu: 0.0.40
codegen_flags: <defaults>
</compile_context>

<pallas_src>
import functools
import math

import jax
import jax.numpy as jnp
from jax.experimental import pallas as pl
from jax.experimental.pallas import tpu as pltpu


# ----------------------------------------------------------------------------
# Small helpers
# ----------------------------------------------------------------------------
def _round_up(x, m):
    return (x + m - 1) // m * m


def _tpu_generation():
    """Best-effort TPU generation detection (5 / 6 / 7). Defaults to 6."""
    try:
        kind = jax.devices()[0].device_kind.lower()
    except Exception:
        return 6
    for g in (7, 6, 5, 4):
        if f"v{g}" in kind:
            return g
    return 6


def _vmem_budget_bytes(gen):
    """Per-step working-set budget with headroom under the scoped-VMEM limit."""
    if gen <= 5:
        return 14 * 1024 * 1024      # v5e: 16 MiB scoped default
    return 28 * 1024 * 1024          # v6e (32/128 MiB), v7x (32/64 MiB per TC)


# ----------------------------------------------------------------------------
# Kernel 1: tiled linear (no bias)   y = x @ w     x:(M,K)  w:(K,N) -> y:(M,N)
# ----------------------------------------------------------------------------
def _linear_kernel(x_ref, w_ref, o_ref, acc_ref):
    @pl.when(pl.program_id(2) == 0)
    def _():
        acc_ref[...] = jnp.zeros_like(acc_ref)

    acc_ref[...] += jnp.dot(
        x_ref[...], w_ref[...], preferred_element_type=jnp.float32
    )

    @pl.when(pl.program_id(2) == pl.num_programs(2) - 1)
    def _():
        o_ref[...] = acc_ref[...].astype(o_ref.dtype)


def linear_pallas(x2d, w, out_dtype=None, gen=None):
    M, K = x2d.shape
    K2, N = w.shape
    assert K == K2
    out_dtype = out_dtype if out_dtype is not None else x2d.dtype
    gen = gen if gen is not None else _tpu_generation()
    budget = _vmem_budget_bytes(gen)
    isz = jnp.dtype(x2d.dtype).itemsize
    osz = jnp.dtype(out_dtype).itemsize

    # Bigger tiles (up to 512) -> closer to HBM roofline, fewer grid steps.
    tm = M if M <= 512 else 512
    if N <= 512:
        tn = N
    else:
        tn = 512
        for cand in (512, 384, 256, 128):           # prefer an even divisor
            if N % cand == 0:
                tn = cand
                break
    # K is the reduction axis: only tile it if the tile divides K exactly.
    tk = K
    if K > 512:
        for cand in (512, 256, 128):
            if K % cand == 0:
                tk = cand
                break

    def step_bytes(tm_):
        return (2 * (tm_ * tk + tk * tn) * isz      # double-buffered inputs
                + 2 * tm_ * tn * osz                # double-buffered output
                + tm_ * tn * 4)                     # f32 accumulator scratch

    # Generation-aware shrink if the working set would overflow scoped VMEM.
    while step_bytes(tm) > budget and tm >= 256 and tm % 256 == 0:
        tm //= 2
    vmem_limit = int(step_bytes(tm) * 1.5) + (2 << 20)

    grid = (pl.cdiv(M, tm), pl.cdiv(N, tn), pl.cdiv(K, tk))
    return pl.pallas_call(
        _linear_kernel,
        out_shape=jax.ShapeDtypeStruct((M, N), out_dtype),
        grid=grid,
        in_specs=[
            pl.BlockSpec((tm, tk), lambda i, j, k: (i, k)),
            pl.BlockSpec((tk, tn), lambda i, j, k: (k, j)),
        ],
        out_specs=pl.BlockSpec((tm, tn), lambda i, j, k: (i, j)),
        scratch_shapes=[pltpu.VMEM((tm, tn), jnp.float32)],
        compiler_params=pltpu.CompilerParams(
            dimension_semantics=("parallel", "parallel", "arbitrary"),
            vmem_limit_bytes=vmem_limit,
        ),
    )(x2d, w)


# ----------------------------------------------------------------------------
# Kernel 2: flash attention over a block of heads.
#   grid = (B, head-block, q-tile, kv-tile)   -- kv innermost / "arbitrary"
#   q/k/v blocks are (tq|tkv, hblk*D) windows into the packed (B,T,3*Hp*D) qkv
#   (feature axis is '(k h d)' order, softmax scale pre-baked into q columns).
#   Output is written directly in lane-dense 'b t (h d)' layout.
# ----------------------------------------------------------------------------
def _flash_attn_kernel(q_ref, k_ref, v_ref, o_ref, m_sc, l_sc, acc_sc, *,
                       hblk, dim_head, tkv, t_total, mask_kv):
    kv = pl.program_id(3)

    @pl.when(kv == 0)
    def _():
        m_sc[...] = jnp.full_like(m_sc, -1e30)
        l_sc[...] = jnp.zeros_like(l_sc)
        acc_sc[...] = jnp.zeros_like(acc_sc)

    if mask_kv:
        # Mask KV positions past the true sequence length (padding in the last
        # kv tile holds unspecified data).
        col_pos = kv * tkv + jax.lax.broadcasted_iota(jnp.int32, (1, tkv), 1)
        valid_cols = col_pos < t_total                       # (1, tkv)
        row_pos = kv * tkv + jax.lax.broadcasted_iota(jnp.int32, (tkv, 1), 0)
        valid_rows = row_pos < t_total                       # (tkv, 1)

    D = dim_head
    for h in range(hblk):                          # small static unroll
        qh = q_ref[:, h * D:(h + 1) * D]           # (tq,  D)
        kh = k_ref[:, h * D:(h + 1) * D]           # (tkv, D)
        vh = v_ref[:, h * D:(h + 1) * D]           # (tkv, D)
        if mask_kv:
            # select (not multiply) so padding garbage can never poison PV.
            vh = jnp.where(valid_rows, vh, jnp.array(0, vh.dtype))

        # scores in f32, contracting D directly (no explicit k transpose)
        s = jax.lax.dot_general(
            qh, kh,
            dimension_numbers=(((1,), (1,)), ((), ())),
            preferred_element_type=jnp.float32,
        )
        if mask_kv:
            s = jnp.where(valid_cols, s, -1e30)

        # online softmax update (all stats in f32)
        m_prev = m_sc[h]                            # (tq, 1)
        l_prev = l_sc[h]
        m_new = jnp.maximum(m_prev, jnp.max(s, axis=-1, keepdims=True))
        alpha = jnp.exp(m_prev - m_new)
        p = jnp.exp(s - m_new)
        l_sc[h] = alpha * l_prev + jnp.sum(p, axis=-1, keepdims=True)

        # PV matmul in the input dtype (bf16 on the bf16 path), f32 accumulate;
        # stream the result straight into the lane-dense accumulator slice.
        pv = jnp.dot(p.astype(vh.dtype), vh, preferred_element_type=jnp.float32)
        acc_sc[:, h * D:(h + 1) * D] = alpha * acc_sc[:, h * D:(h + 1) * D] + pv
        m_sc[h] = m_new

    @pl.when(kv == pl.num_programs(3) - 1)
    def _():
        # Normalize ONCE per (q-tile, head) after all PV matmuls: a (tq, D)
        # multiply instead of a (tq, tkv) one per kv step.
        for h in range(hblk):
            inv_l = pl.reciprocal(l_sc[h], approx=True)
            o_ref[:, h * D:(h + 1) * D] = (
                acc_sc[:, h * D:(h + 1) * D] * inv_l
            ).astype(o_ref.dtype)


def attention_pallas(qkv, heads_pad, dim_head, gen=None):
    """qkv: (B, T, 3*Hp*D), feature axis in contiguous '(k h d)' order with the
    softmax scale already baked into the q columns."""
    B, T, F = qkv.shape
    D = dim_head
    HD = heads_pad * D
    assert F == 3 * HD

    gen = gen if gen is not None else _tpu_generation()
    budget = _vmem_budget_bytes(gen)
    isz = jnp.dtype(qkv.dtype).itemsize

    # Smallest head block whose lane width is a multiple of 128: maximizes grid
    # parallelism (v7x dual TCs) and minimizes per-step VMEM.
    hblk = 128 // math.gcd(128, D)
    assert heads_pad % hblk == 0 and (hblk * D) % 128 == 0
    lane_blk = hblk * D
    n_hb = heads_pad // hblk

    tq = T if T <= 256 else 256
    tkv = T if T <= 512 else 512

    def step_bytes(tq_, tkv_):
        return (2 * (tq_ + 2 * tkv_) * lane_blk * isz      # dbl-buffered q,k,v
                + 2 * tq_ * lane_blk * isz                 # dbl-buffered out
                + tq_ * lane_blk * 4                       # f32 acc scratch
                + 2 * hblk * _round_up(tq_, 8) * 128 * 4   # m/l stats (padded)
                + 2 * tq_ * tkv_ * 4)                      # live f32 scores

    while step_bytes(tq, tkv) > budget:
        if tkv > 128 and tkv % 16 == 0:
            tkv //= 2
        elif tq > 64 and tq % 16 == 0:
            tq //= 2
        else:
            break

    # v7x has 2 TensorCores: make sure the parallel grid axes give >= 2 steps.
    if gen >= 7:
        while B * n_hb * pl.cdiv(T, tq) < 2 and tq % 16 == 0 and tq > 8:
            tq //= 2

    n_q = pl.cdiv(T, tq)
    n_kv = pl.cdiv(T, tkv)
    mask_kv = (T % tkv) != 0
    vmem_limit = int(step_bytes(tq, tkv) * 1.5) + (2 << 20)

    grid = (B, n_hb, n_q, n_kv)
    q_off, k_off, v_off = 0, n_hb, 2 * n_hb        # lane-block offsets of q/k/v

    def in_spec(is_q, off):
        if is_q:
            return pl.BlockSpec((pl.Squeezed(), tq, lane_blk),
                                lambda b, h, qi, ki, off=off: (b, qi, h + off))
        return pl.BlockSpec((pl.Squeezed(), tkv, lane_blk),
                            lambda b, h, qi, ki, off=off: (b, ki, h + off))

    kernel = functools.partial(_flash_attn_kernel, hblk=hblk, dim_head=D,
                               tkv=tkv, t_total=T, mask_kv=mask_kv)
    return pl.pallas_call(
        kernel,
        out_shape=jax.ShapeDtypeStruct((B, T, HD), qkv.dtype),
        grid=grid,
        in_specs=[in_spec(True, q_off), in_spec(False, k_off),
                  in_spec(False, v_off)],
        out_specs=pl.BlockSpec((pl.Squeezed(), tq, lane_blk),
                               lambda b, h, qi, ki: (b, qi, h)),
        scratch_shapes=[
            pltpu.VMEM((hblk, tq, 1), jnp.float32),    # running max m
            pltpu.VMEM((hblk, tq, 1), jnp.float32),    # running sum l
            pltpu.VMEM((tq, lane_blk), jnp.float32),   # output accumulator
        ],
        compiler_params=pltpu.CompilerParams(
            dimension_semantics=("parallel", "parallel", "parallel",
                                 "arbitrary"),
            vmem_limit_bytes=vmem_limit,
        ),
    )(qkv, qkv, qkv)


# ----------------------------------------------------------------------------
# Host-side, one-time weight preparation (parameter-load time in a real module)
# ----------------------------------------------------------------------------
def prepare_qkv_weight(w_qkv_t, heads, dim_head, heads_pad, scale, dtype):
    """PyTorch's forward unpacks qkv with rearrange 'b t (d h k) -> k b h t d',
    i.e. column index = d*(H*3) + h*3 + k. Repack the columns into a contiguous
    '(k h_pad d)' layout (zero columns for padded heads) and bake the softmax
    scale into the q columns."""
    dim = w_qkv_t.shape[0]
    H, D, Hp = heads, dim_head, heads_pad
    ki, hi, di = jnp.meshgrid(jnp.arange(3), jnp.arange(H), jnp.arange(D),
                              indexing="ij")
    old_col = (di * (H * 3) + hi * 3 + ki).reshape(-1)
    new_col = (ki * (Hp * D) + hi * D + di).reshape(-1)
    w = jnp.zeros((dim, 3 * Hp * D), dtype=jnp.float32)
    w = w.at[:, new_col].set(w_qkv_t.astype(jnp.float32)[:, old_col])
    col_scale = jnp.concatenate([
        jnp.full((Hp * D,), scale, jnp.float32),
        jnp.ones((2 * Hp * D,), jnp.float32),
    ])
    return (w * col_scale[None, :]).astype(dtype)


def prepare_w0_weight(w0_t, heads, dim_head, heads_pad, dtype):
    """Pad W0^T rows (in '(h d)' order) with zeros for the padded heads."""
    HD, dim = w0_t.shape
    assert HD == heads * dim_head
    pad = (heads_pad - heads) * dim_head
    w = w0_t.astype(jnp.float32)
    if pad:
        w = jnp.concatenate([w, jnp.zeros((pad, dim), jnp.float32)], axis=0)
    return w.astype(dtype)


# ----------------------------------------------------------------------------
# Module wrapper
# ----------------------------------------------------------------------------
def multi_head_self_attention(x, w_qkv_t, w0_t, heads, dim_head,
                              compute_dtype=jnp.bfloat16):
    """x: (B, T, dim); w_qkv_t: (dim, 3*heads*dim_head); w0_t: (heads*dim_head, dim).
    Weights are stored transposed relative to nn.Linear, i.e. (in, out)."""
    B, T, dim = x.shape
    D = dim_head
    scale = D ** (-0.5)
    gen = _tpu_generation()

    # Pad heads so every q/k/v head-block is 128-lane aligned. Padded heads
    # have zero qkv columns and zero W0 rows -> exact zero contribution.
    hblk = 128 // math.gcd(128, D)
    heads_pad = _round_up(heads, hblk)

    # One-time weight prep (would live at parameter-load time in a real module).
    w_qkv_p = prepare_qkv_weight(w_qkv_t, heads, D, heads_pad, scale,
                                 compute_dtype)
    w0_p = prepare_w0_weight(w0_t, heads, D, heads_pad, compute_dtype)

    xc = x.astype(compute_dtype)
    qkv = linear_pallas(xc.reshape(B * T, dim), w_qkv_p, gen=gen)
    qkv = qkv.reshape(B, T, 3 * heads_pad * D)                # free reshape

    out = attention_pallas(qkv, heads_pad, D, gen=gen)        # 'b t (h d)'

    y = linear_pallas(out.reshape(B * T, heads_pad * D), w0_p,
                      out_dtype=x.dtype, gen=gen)
    return y.reshape(B, T, dim)


# ----------------------------------------------------------------------------
# Pure-JAX reference (mirrors the PyTorch forward exactly)
# ----------------------------------------------------------------------------
def reference(x, w_qkv_t, w0_t, heads, dim_head):
    B, T, dim = x.shape
    scale = dim_head ** (-0.5)
    qkv = x @ w_qkv_t
    # einops: 'b t (d h k) -> k b h t d'
    qkv = qkv.reshape(B, T, dim_head, heads, 3)
    qkv = jnp.transpose(qkv, (4, 0, 3, 1, 2))
    q, k, v = qkv[0], qkv[1], qkv[2]
    s = jnp.einsum("bhid,bhjd->bhij", q, k) * scale
    attn = jax.nn.softmax(s, axis=-1)
    out = jnp.einsum("bhij,bhjd->bhid", attn, v)
    out = jnp.transpose(out, (0, 2, 1, 3)).reshape(B, T, heads * dim_head)
    return out @ w0_t


def _run_case(B, T, dim, heads, dim_head, compute_dtype, atol, rtol, key):
    kx, kq, kw = jax.random.split(key, 3)
    qkv_dim = 3 * heads * dim_head
    x = jax.random.normal(kx, (B, T, dim), dtype=jnp.float32)
    # nn.Linear weights are (out, in); we store the transpose (in, out).
    w_qkv_t = jax.random.normal(kq, (dim, qkv_dim), dtype=jnp.float32) * 0.05
    w0_t = jax.random.normal(kw, (heads * dim_head, dim), dtype=jnp.float32) * 0.05

    y = multi_head_self_attention(x, w_qkv_t, w0_t, heads, dim_head,
                                  compute_dtype=compute_dtype)
    y = jax.block_until_ready(y).astype(jnp.float32)
    y_ref = reference(x, w_qkv_t, w0_t, heads, dim_head)
    err = float(jnp.max(jnp.abs(y - y_ref)))
    assert jnp.allclose(y, y_ref, atol=atol, rtol=rtol), (
        f"mismatch vs reference (max abs err {err}) for "
        f"B={B} T={T} dim={dim} heads={heads} dim_head={dim_head} "
        f"dtype={compute_dtype}"
    )


if __name__ == "__main__":
    key = jax.random.PRNGKey(0)
    k1, k2, k3 = jax.random.split(key, 3)

    # 1) Base config (matches the module defaults), full f32 path.
    _run_case(B=2, T=16, dim=32, heads=8, dim_head=32,
              compute_dtype=jnp.float32, atol=1e-2, rtol=1e-2, key=k1)

    # 2) bf16 matmuls + head padding (heads=6 -> padded to 8).
    _run_case(B=2, T=24, dim=48, heads=6, dim_head=32,
              compute_dtype=jnp.bfloat16, atol=3e-2, rtol=3e-2, key=k2)

    # 3) Longer sequence: exercises the multi-KV-step online softmax,
    #    KV masking (T % tkv != 0) and partial q tiles.
    _run_case(B=1, T=640, dim=64, heads=8, dim_head=64,
              compute_dtype=jnp.float32, atol=1e-2, rtol=1e-2, key=k3)

    print("KERNEL_OK")
</pallas_src>

<mosaic_0001>
module attributes {stable_mosaic.version = 11 : i64} {
  func.func @_linear_kernel(%arg0: i32, %arg1: i32, %arg2: i32, %arg3: memref<32x32xf32, #tpu.memory_space<vmem>>, %arg4: memref<32x384xf32, #tpu.memory_space<vmem>>, %arg5: memref<32x384xf32, #tpu.memory_space<vmem>>, %arg6: memref<32x384xf32, #tpu.memory_space<vmem>>) attributes {dimension_semantics = [#tpu.dimension_semantics<parallel>, #tpu.dimension_semantics<parallel>, #tpu.dimension_semantics<arbitrary>], iteration_bounds = array<i64: 1, 2, 1>, scalar_prefetch = 0 : i64, scratch_operands = 1 : i64, tpu.core_type = #tpu.core_type<tc>, window_params = [{transform_indices = @transform_0, window_bounds = array<i64: 32, 32>}, {transform_indices = @transform_1, window_bounds = array<i64: 32, 384>}, {transform_indices = @transform_2, window_bounds = array<i64: 32, 384>}]} {
    %c0_i32 = arith.constant 0 : i32
    %0 = arith.cmpi eq, %arg2, %c0_i32 : i32
    %1 = arith.extui %0 : i1 to i32
    %c0_i32_0 = arith.constant 0 : i32
    %2 = arith.cmpi ne, %1, %c0_i32_0 : i32
    scf.if %2 {
      %cst_10 = arith.constant 0.000000e+00 : f32
      %12 = vector.broadcast %cst_10 : f32 to vector<32x384xf32>
      %c0_11 = arith.constant 0 : index
      %c0_12 = arith.constant 0 : index
      %13 = vector.load %arg6[%c0_11, %c0_12] : memref<32x384xf32, #tpu.memory_space<vmem>>, vector<32x384xf32>
      tpu.vector_store %arg6[%c0_11, %c0_12], %12 {strides = array<i32>} : memref<32x384xf32, #tpu.memory_space<vmem>>, vector<32x384xf32>,
    } else {
    }
    %c0 = arith.constant 0 : index
    %c0_1 = arith.constant 0 : index
    %3 = vector.load %arg6[%c0, %c0_1] : memref<32x384xf32, #tpu.memory_space<vmem>>, vector<32x384xf32>
    %c0_2 = arith.constant 0 : index
    %c0_3 = arith.constant 0 : index
    %4 = vector.load %arg3[%c0_2, %c0_3] : memref<32x32xf32, #tpu.memory_space<vmem>>, vector<32x32xf32>
    %c0_4 = arith.constant 0 : index
    %c0_5 = arith.constant 0 : index
    %5 = vector.load %arg4[%c0_4, %c0_5] : memref<32x384xf32, #tpu.memory_space<vmem>>, vector<32x384xf32>
    %cst = arith.constant dense<0.000000e+00> : vector<32x384xf32>
    %6 = tpu.matmul %4, %5, %cst {dimension_numbers = #tpu.dot_dimension_numbers<[1], [0], [0], [1], [0, 0, 1, 1], [], []>} : vector<32x32xf32>, vector<32x384xf32>, vector<32x384xf32> -> vector<32x384xf32>
    %7 = arith.addf %3, %6 : vector<32x384xf32>
    %c0_6 = arith.constant 0 : index
    %c0_7 = arith.constant 0 : index
    %8 = vector.load %arg6[%c0_6, %c0_7] : memref<32x384xf32, #tpu.memory_space<vmem>>, vector<32x384xf32>
    tpu.vector_store %arg6[%c0_6, %c0_7], %7 {strides = array<i32>} : memref<32x384xf32, #tpu.memory_space<vmem>>, vector<32x384xf32>,
    %c0_i32_8 = arith.constant 0 : i32
    %9 = arith.cmpi eq, %arg2, %c0_i32_8 : i32
    %10 = arith.extui %9 : i1 to i32
    %c0_i32_9 = arith.constant 0 : i32
    %11 = arith.cmpi ne, %10, %c0_i32_9 : i32
    scf.if %11 {
      %c0_10 = arith.constant 0 : index
      %c0_11 = arith.constant 0 : index
      %12 = vector.load %arg6[%c0_10, %c0_11] : memref<32x384xf32, #tpu.memory_space<vmem>>, vector<32x384xf32>
      %c0_12 = arith.constant 0 : index
      %c0_13 = arith.constant 0 : index
      %13 = vector.load %arg5[%c0_12, %c0_13] : memref<32x384xf32, #tpu.memory_space<vmem>>, vector<32x384xf32>
      tpu.vector_store %arg5[%c0_12, %c0_13], %12 {strides = array<i32>} : memref<32x384xf32, #tpu.memory_space<vmem>>, vector<32x384xf32>,
    } else {
    }
    return
  }
  func.func @transform_0(%arg0: i32, %arg1: i32, %arg2: i32) -> (i32, i32) {
    %c0_i32 = arith.constant 0 : i32
    return %arg0, %arg2 : i32, i32
  }
  func.func @transform_1(%arg0: i32, %arg1: i32, %arg2: i32) -> (i32, i32) {
    %c0_i32 = arith.constant 0 : i32
    return %arg2, %arg1 : i32, i32
  }
  func.func @transform_2(%arg0: i32, %arg1: i32, %arg2: i32) -> (i32, i32) {
    %c0_i32 = arith.constant 0 : i32
    return %arg0, %arg1 : i32, i32
  }
}

</mosaic_0001>

<llo_original>
// kernel: tpu_custom_call.1
$region0: #{tpu_custom_call.1}
  #allocation0 [shape = 'u32[]', space=smem, size = 0x4, offset = 0x4, fixed_abs, tag = 'smem constant byte address 0x4 - core index']
  #allocation1 [shape = 'u32[144,128]{1,0:T(1,128)}', space=vmem, size = 0x12000, scoped, tag = 'internal scratch']
  #allocation2 [shape = 'f32[32,384]{1,0:T(8,128)}', space=vmem, size = 0xc000, scoped, tag = 'scratch operand']
  %s0 = inlined_call_operand.hbm [shape: f32[32,32], index: 0, kind: input, shape index: {}]
  %s1 = inlined_call_operand.hbm [shape: f32[32,768], index: 1, kind: input, shape index: {}]
  %s2 = inlined_call_operand.hbm [shape: f32[32,768], index: 2, kind: output, shape index: {}]
  %s3 = sld [smem:[#allocation0]]
  $region57: #{tpu_custom_call.1} parent=0
    _
  %s5 = ssub.s32 1, %s3
  %s6 = scalar_select 0, %s5, %s3
  $region1: #{tpu_custom_call.1} parent=0
    #allocation3 [shape = 'u8[16384]{0}', space=vmem, size = 0x4000, scoped, tag = 'input window, operand 0, single buffered']
    #allocation4 [shape = 's32[2]{0}', space=sflag, size = 0x8, scoped, tag = 'scoped memory for tpu_custom_call.1']
    #allocation5 [shape = 's32[2]{0}', space=sflag, size = 0x8, scoped, tag = 'scoped memory for tpu_custom_call.1']
    #allocation6 [shape = 'u8[98304]{0}', space=vmem, size = 0x18000, scoped, tag = 'input window, operand 1']
    #allocation7 [shape = 's32[2]{0}', space=sflag, size = 0x8, scoped, tag = 'scoped memory for tpu_custom_call.1']
    #allocation8 [shape = 'u8[98304]{0}', space=vmem, size = 0x18000, scoped, tag = 'output window, operand 0']
    %7 = vsyncpa [#allocation4], 0
    %8 = vsyncpa [#allocation7], 0
    %s9 = scalar_lea.sflag [#allocation7], 1
    %10 = vsyncpa %s9, 0
    %11 = vsyncpa [#allocation5], 0
    %s12 = scalar_lea.sflag [#allocation5], 1
    %13 = vsyncpa %s12, 0
    loop: start=0, step=1, limit=4
    $region2: #{tpu_custom_call.1} parent=1 // loop_pre_header
      _
    $region3: #{tpu_custom_call.1} parent=1 // loop_header
      %s15 = sphi 0, %s19
      %p16 = scmp.ge.s32.totalorder %s15, 4
      %s22 = sphi 0, %s41
      %s23 = sphi 0, %s37
      %s24 = sphi 0, %s33
      %s25 = sphi 0, %s22
      %s26 = sphi 0, %s23
      %s27 = sphi 0, %s24
      %s28 = sphi 0, %s25
      %s29 = sphi 0, %s26
      %s30 = sphi 0, %s27
      %s46 = sphi 0, %s48
      %s49 = sphi 0, %s46
      %s50 = sphi 0, %s49
      %s66 = sphi 0, %s50
      %s74 = sphi 0, %s76
      %s77 = sphi 0, %s74
      %s78 = sphi 0, %s77
      %s94 = sphi 0, %s78
      %s102 = sphi 0, %s104
      %s105 = sphi 0, %s102
      %s106 = sphi 0, %s105
      %s122 = sphi 0, %s106
    $region4: #{tpu_custom_call.1} parent=1 // loop_header_branch
      %18 = sbr.rel (%p16) target = $region8
    $region5: #{tpu_custom_call.1} parent=1 // loop_body
      %s20 = ssub.s32 %s15, 1
      %s21 = ssub.s32 %s15, 2
      %s31 = sadd.s32 1, %s24
      %p32 = scmp.ge.s32.totalorder %s31, 1
      %s33 = scalar_select %p32, 0, %s31
      %s34 = sadd.s32 1, %s23
      %s35 = scalar_select %p32, %s34, %s23
      %p36 = scmp.ge.s32.totalorder %s35, 2
      %s37 = scalar_select %p36, 0, %s35
      %s38 = sadd.s32 1, %s22
      %s39 = scalar_select %p36, %s38, %s22
      %p40 = scmp.ge.s32.totalorder %s39, 1
      %s41 = scalar_select %p40, 0, %s39
      %s42 = ssub.s32 %s22, %s41
      %s43 = ssub.s32 %s24, %s33
      %s44 = sor.u32 %s42, %s43
      %p45 = scmp.eq.s32.totalorder %s44, 0
      %s47 = sadd.s32 %s46, 1
      %s48 = scalar_select %p45, %s46, %s47
      %p51 = pneg %p45
      %p52 = scmp.eq.s32.totalorder %s15, 1
      %p53 = por %p51, %p52
      %p54 = scmp.ne.s32.totalorder %s46, %s49
      %p55 = scmp.eq.s32.totalorder %s15, 0
      %p56 = por %p54, %p55
      %p57 = scmp.ne.s32.totalorder %s46, %s49
      %p58 = scmp.eq.s32.totalorder %s20, 1
      %p59 = por %p57, %p58
      %p60 = scmp.ne.s32.totalorder %s49, %s50
      %p61 = scmp.eq.s32.totalorder %s20, 0
      %p62 = por %p60, %p61
      %p63 = scmp.ne.s32.totalorder %s49, %s50
      %p64 = scmp.eq.s32.totalorder %s21, 1
      %p65 = por %p63, %p64
      %p67 = scmp.ne.s32.totalorder %s50, %s66
      %p68 = scmp.eq.s32.totalorder %s21, 0
      %p69 = por %p67, %p68
      %s70 = ssub.s32 %s24, %s33
      %s71 = ssub.s32 %s23, %s37
      %s72 = sor.u32 %s70, %s71
      %p73 = scmp.eq.s32.totalorder %s72, 0
      %s75 = sadd.s32 %s74, 1
      %s76 = scalar_select %p73, %s74, %s75
      %p79 = pneg %p73
      %p80 = scmp.eq.s32.totalorder %s15, 1
      %p81 = por %p79, %p80
      %p82 = scmp.ne.s32.totalorder %s74, %s77
      %p83 = scmp.eq.s32.totalorder %s15, 0
      %p84 = por %p82, %p83
      %p85 = scmp.ne.s32.totalorder %s74, %s77
      %p86 = scmp.eq.s32.totalorder %s20, 1
      %p87 = por %p85, %p86
      %p88 = scmp.ne.s32.totalorder %s77, %s78
      %p89 = scmp.eq.s32.totalorder %s20, 0
      %p90 = por %p88, %p89
      %p91 = scmp.ne.s32.totalorder %s77, %s78
      %p92 = scmp.eq.s32.totalorder %s21, 1
      %p93 = por %p91, %p92
      %p95 = scmp.ne.s32.totalorder %s78, %s94
      %p96 = scmp.eq.s32.totalorder %s21, 0
      %p97 = por %p95, %p96
      %s98 = ssub.s32 %s22, %s41
      %s99 = ssub.s32 %s23, %s37
      %s100 = sor.u32 %s98, %s99
      %p101 = scmp.eq.s32.totalorder %s100, 0
      %s103 = sadd.s32 %s102, 1
      %s104 = scalar_select %p101, %s102, %s103
      %p107 = pneg %p101
      %p108 = scmp.eq.s32.totalorder %s15, 1
      %p109 = por %p107, %p108
      %p110 = scmp.ne.s32.totalorder %s102, %s105
      %p111 = scmp.eq.s32.totalorder %s15, 0
      %p112 = por %p110, %p111
      %p113 = scmp.ne.s32.totalorder %s102, %s105
      %p114 = scmp.eq.s32.totalorder %s20, 1
      %p115 = por %p113, %p114
      %p116 = scmp.ne.s32.totalorder %s105, %s106
      %p117 = scmp.eq.s32.totalorder %s20, 0
      %p118 = por %p116, %p117
      %p119 = scmp.ne.s32.totalorder %s105, %s106
      %p120 = scmp.eq.s32.totalorder %s21, 1
      %p121 = por %p119, %p120
      %p123 = scmp.ne.s32.totalorder %s106, %s122
      %p124 = scmp.eq.s32.totalorder %s21, 0
      %p125 = por %p123, %p124
      %p126 = scmp.le.s32.totalorder 1, %s15
      %p127 = scmp.lt.s32.totalorder %s15, 3
      %p128 = pnand %p126, %p127
      %p129 = pneg %p128
      // Predicated region
      $region9: #{tpu_custom_call.1} parent=5 // pred_check
        _
      $region10: #{tpu_custom_call.1} parent=5 // pred_check_branch
        %131 = sbr.rel (%p128) target = $region12
      $region11: #{tpu_custom_call.1} parent=5 // pred_region
        %s132 = ssub.s32 %s15, 1
        // Predicated region
        $region13: #{tpu_custom_call.1} parent=11 // pred_check
          %p133 = pneg %p62
        $region14: #{tpu_custom_call.1} parent=11 // pred_check_branch
          %135 = sbr.rel (%p133) target = $region16
        $region15: #{tpu_custom_call.1} parent=11 // pred_region
          %s136 = smul.u32 4, %s25
          %s138 = ssub.s32 512, 512
          %139 = vsyncadd [#allocation4], %s138
          %s140 = sadd.s32 %s27, %s136
          %s141 = smul.addr %s140, 128
          %s142 = scalar_lea.hbm %s0, %s141
          %s143 = sshll.u32 [#allocation3], 4
          %s144 = int_to_ptr.vmem [resolvable:$true] %s143
          %149 = dma.hbm_to_vmem [thread:$0]  %s142, 512, %s144, [#allocation4], 128, 128, 8
        $region16: #{tpu_custom_call.1} parent=11 // pred_fallthru
          _
      $region12: #{tpu_custom_call.1} parent=5 // pred_fallthru
        _
      %p150 = scmp.lt.s32.totalorder %s15, 2
      // Predicated region
      $region17: #{tpu_custom_call.1} parent=5 // pred_check
        %p151 = pneg %p150
      $region18: #{tpu_custom_call.1} parent=5 // pred_check_branch
        %153 = sbr.rel (%p151) target = $region20
      $region19: #{tpu_custom_call.1} parent=5 // pred_region
        // Predicated region
        $region21: #{tpu_custom_call.1} parent=19 // pred_check
          %p154 = pneg %p84
        $region22: #{tpu_custom_call.1} parent=19 // pred_check_branch
          %156 = sbr.rel (%p154) target = $region24
        $region23: #{tpu_custom_call.1} parent=19 // pred_region
          %s157 = sand.u32 %s74, 1
          %s158 = scalar_lea.sflag [#allocation7], %s157
          %s159 = sand.u32 %s74, 1
          %s160 = smul.addr %s159, 96
          %s161 = scalar_lea.vmem [#allocation6], %s160
          %s162 = smul.u32 4, %s24
          %s163 = smul.u32 3, %s23
          %s165 = ssub.s32 1536, 1536
          %166 = vsyncadd %s158, %s165
          %s167 = smul.addr %s162, 6
          %s168 = sadd.s32 %s163, %s167
          %s169 = smul.addr %s168, 128
          %s170 = scalar_lea.hbm %s1, %s169
          %s171 = sshll.u32 %s161, 4
          %s172 = int_to_ptr.vmem [resolvable:$true] %s171
          %177 = dma.hbm_to_vmem [thread:$0]  %s170, 1536, %s172, %s158, 768, 384, 24
        $region24: #{tpu_custom_call.1} parent=19 // pred_fallthru
          _
      $region20: #{tpu_custom_call.1} parent=5 // pred_fallthru
        _
      %p178 = scmp.le.s32.totalorder 1, %s15
      %p179 = scmp.lt.s32.totalorder %s15, 3
      %p180 = pnand %p178, %p179
      %p181 = pneg %p180
      // Predicated region
      $region25: #{tpu_custom_call.1} parent=5 // pred_check
        _
      $region26: #{tpu_custom_call.1} parent=5 // pred_check_branch
        %183 = sbr.rel (%p180) target = $region28
      $region27: #{tpu_custom_call.1} parent=5 // pred_region
        %s184 = ssub.s32 %s15, 1
        // Predicated region
        $region29: #{tpu_custom_call.1} parent=27 // pred_check
          %p185 = pneg %p62
        $region30: #{tpu_custom_call.1} parent=27 // pred_check_branch
          %187 = sbr.rel (%p185) target = $region32
        $region31: #{tpu_custom_call.1} parent=27 // pred_region
          %188 = dma.done [#allocation4], 512
        $region32: #{tpu_custom_call.1} parent=27 // pred_fallthru
          _
        %s189 = sand.u32 %s77, 1
        %s190 = scalar_lea.sflag [#allocation7], %s189
        %s191 = sand.u32 %s77, 1
        %s192 = smul.addr %s191, 96
        %s193 = scalar_lea.vmem [#allocation6], %s192
        // Predicated region
        $region33: #{tpu_custom_call.1} parent=27 // pred_check
          %p194 = pneg %p90
        $region34: #{tpu_custom_call.1} parent=27 // pred_check_branch
          %196 = sbr.rel (%p194) target = $region36
        $region35: #{tpu_custom_call.1} parent=27 // pred_region
          %197 = dma.done %s190, 1536
        $region36: #{tpu_custom_call.1} parent=27 // pred_fallthru
          _
        %p198 = pneg %p62
        %p199 = pneg %p59
        %s200 = sand.u32 %s77, 1
        %s201 = scalar_lea.sflag [#allocation7], %s200
        %s202 = sand.u32 %s77, 1
        %s203 = smul.addr %s202, 96
        %s204 = scalar_lea.vmem [#allocation6], %s203
        %p205 = pneg %p90
        %p206 = pneg %p87
        %p207 = pneg %p118
        %p208 = pneg %p115
        %s209 = sand.u32 %s105, 1
        %s210 = scalar_lea.sflag [#allocation5], %s209
        %s211 = sand.u32 %s105, 1
        %s212 = smul.addr %s211, 96
        %s213 = scalar_lea.vmem [#allocation8], %s212
        %s214 = smul.u32 4, %s25
        %s215 = smul.u32 4, %s27
        %s216 = smul.u32 3, %s26
        %s217 = smul.u32 4, %s25
        %s218 = smul.u32 3, %s26
        %p219 = scmp.eq.s32.totalorder %s27, 0
        // Predicated region
        $region37: #{tpu_custom_call.1} parent=27 // pred_check
          %p220 = pneg %p219
        $region38: #{tpu_custom_call.1} parent=27 // pred_check_branch
          %222 = sbr.rel (%p220) target = $region40
        $region39: #{tpu_custom_call.1} parent=27 // pred_region
          %223 = vst [vmem:[#allocation2] sm:$0xff] 0.0
          %224 = vst [vmem:[#allocation2 + $0x8] sm:$0xff] 0.0
          %225 = vst [vmem:[#allocation2 + $0x10] sm:$0xff] 0.0
          %226 = vst [vmem:[#allocation2 + $0x18] sm:$0xff] 0.0
          %227 = vst [vmem:[#allocation2 + $0x20] sm:$0xff] 0.0
          %228 = vst [vmem:[#allocation2 + $0x28] sm:$0xff] 0.0
          %229 = vst [vmem:[#allocation2 + $0x30] sm:$0xff] 0.0
          %230 = vst [vmem:[#allocation2 + $0x38] sm:$0xff] 0.0
          %231 = vst [vmem:[#allocation2 + $0x40] sm:$0xff] 0.0
          %232 = vst [vmem:[#allocation2 + $0x48] sm:$0xff] 0.0
          %233 = vst [vmem:[#allocation2 + $0x50] sm:$0xff] 0.0
          %234 = vst [vmem:[#allocation2 + $0x58] sm:$0xff] 0.0
        $region40: #{tpu_custom_call.1} parent=27 // pred_fallthru
          _
        %v235 = vld [vmem:[#allocation2] sm:$0xff]
        %v236 = vld [vmem:[#allocation2 + $0x8] sm:$0xff]
        %v237 = vld [vmem:[#allocation2 + $0x10] sm:$0xff]
        %v238 = vld [vmem:[#allocation2 + $0x18] sm:$0xff]
        %v239 = vld [vmem:[#allocation2 + $0x20] sm:$0xff]
        %v240 = vld [vmem:[#allocation2 + $0x28] sm:$0xff]
        %v241 = vld [vmem:[#allocation2 + $0x30] sm:$0xff]
        %v242 = vld [vmem:[#allocation2 + $0x38] sm:$0xff]
        %v243 = vld [vmem:[#allocation2 + $0x40] sm:$0xff]
        %v244 = vld [vmem:[#allocation2 + $0x48] sm:$0xff]
        %v245 = vld [vmem:[#allocation2 + $0x50] sm:$0xff]
        %v246 = vld [vmem:[#allocation2 + $0x58] sm:$0xff]
        %v247 = vld [vmem:[#allocation3] sm:$0xff]
        %v248 = vld [vmem:[#allocation3 + $0x8] sm:$0xff]
        %v249 = vld [vmem:[#allocation3 + $0x10] sm:$0xff]
        %v250 = vld [vmem:[#allocation3 + $0x18] sm:$0xff]
        %v251 = vld [vmem:[%s193] sm:$0xff]
        %v252 = vld [vmem:[%s193 + $0x8] sm:$0xff]
        %v253 = vld [vmem:[%s193 + $0x10] sm:$0xff]
        %v254 = vld [vmem:[%s193 + $0x18] sm:$0xff]
        %v255 = vld [vmem:[%s193 + $0x20] sm:$0xff]
        %v256 = vld [vmem:[%s193 + $0x28] sm:$0xff]
        %v257 = vld [vmem:[%s193 + $0x30] sm:$0xff]
        %v258 = vld [vmem:[%s193 + $0x38] sm:$0xff]
        %v259 = vld [vmem:[%s193 + $0x40] sm:$0xff]
        %v260 = vld [vmem:[%s193 + $0x48] sm:$0xff]
        %v261 = vld [vmem:[%s193 + $0x50] sm:$0xff]
        %v262 = vld [vmem:[%s193 + $0x58] sm:$0xff]
        %vm263 = vcmask 261120
        %v265 = vsel %vm263, %v247, 0
        %v268 = vsel %vm263, %v248, 0
        %v271 = vsel %vm263, %v249, 0
        %v274 = vsel %vm263, %v250, 0
        %276 = vmatprep.subr.mxu0 %v252
        %277 = vmatpush1.msra.mxu0 %v251
        %278 = vmatprep.subr.mxu0 %v255
        %279 = vmatpush1.msra.mxu0 %v254
        %280 = vmatprep.subr.mxu0 %v258
        %281 = vmatpush1.msra.mxu0 %v257
        %282 = vmatprep.subr.mxu0 %v261
        %283 = vmatpush1.msra.mxu0 %v260
        %284 = vmatprep.subr.mxu0 0.0
        %285 = vmatpush1.msra.mxu0 0.0
        %286 = vmatprep.subr.mxu0 0.0
        %287 = vmatpush1.msra.mxu0 0.0
        %288 = vmatprep.subr.mxu0 0.0
        %289 = vmatpush1.msra.mxu0 0.0
        %290 = vmatprep.subr.mxu0 0.0
        %291 = vmatpush1.msra.mxu0 0.0
        %292 = vmatprep.subr.mxu0 0.0
        %293 = vmatpush1.msra.mxu0 0.0
        %294 = vmatprep.subr.mxu0 0.0
        %295 = vmatpush1.msra.mxu0 0.0
        %296 = vmatprep.subr.mxu0 0.0
        %297 = vmatpush1.msra.mxu0 0.0
        %298 = vmatprep.subr.mxu0 0.0
        %299 = vmatpush1.msra.mxu0 0.0
        %300 = vmatprep.subr.mxu0 0.0
        %301 = vmatpush1.msra.mxu0 0.0
        %302 = vmatprep.subr.mxu0 0.0
        %303 = vmatpush1.msra.mxu0 0.0
        %304 = vmatprep.subr.mxu0 0.0
        %305 = vmatpush1.msra.mxu0 0.0
        %306 = vmatprep.subr.mxu0 0.0
        %307 = vmatpush1.msra.mxu0 0.0
        %308 = vmatprep.subr.mxu0 0.0
        %309 = vmatpush1.msra.mxu0 0.0
        %310 = vmatprep.subr.mxu0 0.0
        %311 = vmatpush1.msra.mxu0 0.0
        %312 = vmatprep.subr.mxu0 0.0
        %313 = vmatpush1.msra.mxu0 0.0
        %314 = vmatprep.subr.mxu0 0.0
        %315 = vmatpush1.msra.mxu0 0.0
        %316 = vmatprep.subr.mxu0 0.0
        %317 = vmatpush1.msra.mxu0 0.0
        %318 = vmatprep.subr.mxu0 0.0
        %319 = vmatpush1.msra.mxu0 0.0
        %320 = vmatprep.subr.mxu0 0.0
        %321 = vmatpush1.msra.mxu0 0.0
        %322 = vmatprep.subr.mxu0 0.0
        %323 = vmatpush1.msra.mxu0 0.0
        %324 = vmatprep.subr.mxu0 0.0
        %325 = vmatpush1.msra.mxu0 0.0
        %326 = vmatprep.subr.mxu0 0.0
        %327 = vmatpush1.msra.mxu0 0.0
        %328 = vmatprep.subr.mxu0 0.0
        %329 = vmatpush1.msra.mxu0 0.0
        %330 = vmatprep.subr.mxu0 0.0
        %331 = vmatpush1.msra.mxu0 0.0
        %332 = vmatprep.subr.mxu0 0.0
        %333 = vmatpush1.msra.mxu0 0.0
        %334 = vmatprep.subr.mxu0 0.0
        %335 = vmatpush1.msra.mxu0 0.0
        %336 = vmatprep.subr.mxu0 0.0
        %337 = vmatpush1.msra.mxu0 0.0
        %338 = vmatprep.subr.mxu0 0.0
        %339 = vmatpush1.msra.mxu0 0.0
        %340 = vmatprep.mubr.f32.mxu0 0.0
        %341 = vmatmul.mubr.f32.gmra.mrb[0].mxu0 %v265
        %v342 = vpop.f32.mrb[0].mxu0
        %v343 = vadd.f32 0.0, %v342
        %v344 = vpop.f32.mrb[0].mxu0
        %v345 = vadd.f32 0.0, %v344
        %346 = vmatprep.mubr.f32.mxu0 0.0
        %347 = vmatmul.mubr.f32.gmra.mrb[0].mxu0 %v268
        %v348 = vpop.f32.mrb[0].mxu0
        %v349 = vadd.f32 0.0, %v348
        %v350 = vpop.f32.mrb[0].mxu0
        %v351 = vadd.f32 0.0, %v350
        %352 = vmatprep.mubr.f32.mxu0 0.0
        %353 = vmatmul.mubr.f32.gmra.mrb[0].mxu0 %v271
        %v354 = vpop.f32.mrb[0].mxu0
        %v355 = vadd.f32 0.0, %v354
        %v356 = vpop.f32.mrb[0].mxu0
        %v357 = vadd.f32 0.0, %v356
        %358 = vmatprep.mubr.f32.mxu0 0.0
        %359 = vmatmul.mubr.f32.gmra.mrb[0].mxu0 %v274
        %v360 = vpop.f32.mrb[0].mxu0
        %v361 = vadd.f32 0.0, %v360
        %v362 = vpop.f32.mrb[0].mxu0
        %v363 = vadd.f32 0.0, %v362
        %364 = vdwg.mxu0
        %365 = vmatprep.subr.mxu0 0.0
        %366 = vmatpush1.msra.mxu0 %v253
        %367 = vmatprep.subr.mxu0 0.0
        %368 = vmatpush1.msra.mxu0 %v256
        %369 = vmatprep.subr.mxu0 0.0
        %370 = vmatpush1.msra.mxu0 %v259
        %371 = vmatprep.subr.mxu0 0.0
        %372 = vmatpush1.msra.mxu0 %v262
        %373 = vmatprep.subr.mxu0 0.0
        %374 = vmatpush1.msra.mxu0 0.0
        %375 = vmatprep.subr.mxu0 0.0
        %376 = vmatpush1.msra.mxu0 0.0
        %377 = vmatprep.subr.mxu0 0.0
        %378 = vmatpush1.msra.mxu0 0.0
        %379 = vmatprep.subr.mxu0 0.0
        %380 = vmatpush1.msra.mxu0 0.0
        %381 = vmatprep.subr.mxu0 0.0
        %382 = vmatpush1.msra.mxu0 0.0
        %383 = vmatprep.subr.mxu0 0.0
        %384 = vmatpush1.msra.mxu0 0.0
        %385 = vmatprep.subr.mxu0 0.0
        %386 = vmatpush1.msra.mxu0 0.0
        %387 = vmatprep.subr.mxu0 0.0
        %388 = vmatpush1.msra.mxu0 0.0
        %389 = vmatprep.subr.mxu0 0.0
        %390 = vmatpush1.msra.mxu0 0.0
        %391 = vmatprep.subr.mxu0 0.0
        %392 = vmatpush1.msra.mxu0 0.0
        %393 = vmatprep.subr.mxu0 0.0
        %394 = vmatpush1.msra.mxu0 0.0
        %395 = vmatprep.subr.mxu0 0.0
        %396 = vmatpush1.msra.mxu0 0.0
        %397 = vmatprep.subr.mxu0 0.0
        %398 = vmatpush1.msra.mxu0 0.0
        %399 = vmatprep.subr.mxu0 0.0
        %400 = vmatpush1.msra.mxu0 0.0
        %401 = vmatprep.subr.mxu0 0.0
        %402 = vmatpush1.msra.mxu0 0.0
        %403 = vmatprep.subr.mxu0 0.0
        %404 = vmatpush1.msra.mxu0 0.0
        %405 = vmatprep.subr.mxu0 0.0
        %406 = vmatpush1.msra.mxu0 0.0
        %407 = vmatprep.subr.mxu0 0.0
        %408 = vmatpush1.msra.mxu0 0.0
        %409 = vmatprep.subr.mxu0 0.0
        %410 = vmatpush1.msra.mxu0 0.0
        %411 = vmatprep.subr.mxu0 0.0
        %412 = vmatpush1.msra.mxu0 0.0
        %413 = vmatprep.subr.mxu0 0.0
        %414 = vmatpush1.msra.mxu0 0.0
        %415 = vmatprep.subr.mxu0 0.0
        %416 = vmatpush1.msra.mxu0 0.0
        %417 = vmatprep.subr.mxu0 0.0
        %418 = vmatpush1.msra.mxu0 0.0
        %419 = vmatprep.subr.mxu0 0.0
        %420 = vmatpush1.msra.mxu0 0.0
        %421 = vmatprep.subr.mxu0 0.0
        %422 = vmatpush1.msra.mxu0 0.0
        %423 = vmatprep.subr.mxu0 0.0
        %424 = vmatpush1.msra.mxu0 0.0
        %425 = vmatprep.subr.mxu0 0.0
        %426 = vmatpush1.msra.mxu0 0.0
        %427 = vmatprep.subr.mxu0 0.0
        %428 = vmatpush1.msra.mxu0 0.0
        %429 = vmatprep.mubr.f32.mxu0 0.0
        %430 = vmatmul.mubr.f32.gmra.mrb[0].mxu0 %v265
        %v431 = vpop.f32.mrb[0].mxu0
        %v432 = vadd.f32 0.0, %v431
        %v433 = vpop.f32.mrb[0].mxu0
        %434 = vmatprep.mubr.f32.mxu0 0.0
        %435 = vmatmul.mubr.f32.gmra.mrb[0].mxu0 %v268
        %v436 = vpop.f32.mrb[0].mxu0
        %v437 = vadd.f32 0.0, %v436
        %v438 = vpop.f32.mrb[0].mxu0
        %439 = vmatprep.mubr.f32.mxu0 0.0
        %440 = vmatmul.mubr.f32.gmra.mrb[0].mxu0 %v271
        %v441 = vpop.f32.mrb[0].mxu0
        %v442 = vadd.f32 0.0, %v441
        %v443 = vpop.f32.mrb[0].mxu0
        %444 = vmatprep.mubr.f32.mxu0 0.0
        %445 = vmatmul.mubr.f32.gmra.mrb[0].mxu0 %v274
        %v446 = vpop.f32.mrb[0].mxu0
        %v447 = vadd.f32 0.0, %v446
        %v448 = vpop.f32.mrb[0].mxu0
        %449 = vdwg.mxu0
        %v450 = vadd.f32 %v235, %v343
        %v451 = vadd.f32 %v236, %v345
        %v452 = vadd.f32 %v237, %v432
        %v453 = vadd.f32 %v238, %v349
        %v454 = vadd.f32 %v239, %v351
        %v455 = vadd.f32 %v240, %v437
        %v456 = vadd.f32 %v241, %v355
        %v457 = vadd.f32 %v242, %v357
        %v458 = vadd.f32 %v243, %v442
        %v459 = vadd.f32 %v244, %v361
        %v460 = vadd.f32 %v245, %v363
        %v461 = vadd.f32 %v246, %v447
        %462 = vst [vmem:[#allocation2] sm:$0xff] %v450
        %463 = vst [vmem:[#allocation2 + $0x8] sm:$0xff] %v451
        %464 = vst [vmem:[#allocation2 + $0x10] sm:$0xff] %v452
        %465 = vst [vmem:[#allocation2 + $0x18] sm:$0xff] %v453
        %466 = vst [vmem:[#allocation2 + $0x20] sm:$0xff] %v454
        %467 = vst [vmem:[#allocation2 + $0x28] sm:$0xff] %v455
        %468 = vst [vmem:[#allocation2 + $0x30] sm:$0xff] %v456
        %469 = vst [vmem:[#allocation2 + $0x38] sm:$0xff] %v457
        %470 = vst [vmem:[#allocation2 + $0x40] sm:$0xff] %v458
        %471 = vst [vmem:[#allocation2 + $0x48] sm:$0xff] %v459
        %472 = vst [vmem:[#allocation2 + $0x50] sm:$0xff] %v460
        %473 = vst [vmem:[#allocation2 + $0x58] sm:$0xff] %v461
        // Predicated region
        $region41: #{tpu_custom_call.1} parent=27 // pred_check
          %p474 = pneg %p219
        $region42: #{tpu_custom_call.1} parent=27 // pred_check_branch
          %476 = sbr.rel (%p474) target = $region44
        $region43: #{tpu_custom_call.1} parent=27 // pred_region
          %v477 = vld [vmem:[#allocation2] sm:$0xff]
          %v478 = vld [vmem:[#allocation2 + $0x8] sm:$0xff]
          %v479 = vld [vmem:[#allocation2 + $0x10] sm:$0xff]
          %v480 = vld [vmem:[#allocation2 + $0x18] sm:$0xff]
          %v481 = vld [vmem:[#allocation2 + $0x20] sm:$0xff]
          %v482 = vld [vmem:[#allocation2 + $0x28] sm:$0xff]
          %v483 = vld [vmem:[#allocation2 + $0x30] sm:$0xff]
          %v484 = vld [vmem:[#allocation2 + $0x38] sm:$0xff]
          %v485 = vld [vmem:[#allocation2 + $0x40] sm:$0xff]
          %v486 = vld [vmem:[#allocation2 + $0x48] sm:$0xff]
          %v487 = vld [vmem:[#allocation2 + $0x50] sm:$0xff]
          %v488 = vld [vmem:[#allocation2 + $0x58] sm:$0xff]
          %489 = vst [vmem:[%s213] sm:$0xff] %v477
          %490 = vst [vmem:[%s213 + $0x8] sm:$0xff] %v478
          %491 = vst [vmem:[%s213 + $0x10] sm:$0xff] %v479
          %492 = vst [vmem:[%s213 + $0x18] sm:$0xff] %v480
          %493 = vst [vmem:[%s213 + $0x20] sm:$0xff] %v481
          %494 = vst [vmem:[%s213 + $0x28] sm:$0xff] %v482
          %495 = vst [vmem:[%s213 + $0x30] sm:$0xff] %v483
          %496 = vst [vmem:[%s213 + $0x38] sm:$0xff] %v484
          %497 = vst [vmem:[%s213 + $0x40] sm:$0xff] %v485
          %498 = vst [vmem:[%s213 + $0x48] sm:$0xff] %v486
          %499 = vst [vmem:[%s213 + $0x50] sm:$0xff] %v487
          %500 = vst [vmem:[%s213 + $0x58] sm:$0xff] %v488
        $region44: #{tpu_custom_call.1} parent=27 // pred_fallthru
          _
        %s501 = sand.u32 %s105, 1
        %s502 = scalar_lea.sflag [#allocation5], %s501
        %s503 = sand.u32 %s105, 1
        %s504 = smul.addr %s503, 96
        %s505 = scalar_lea.vmem [#allocation8], %s504
        // Predicated region
        $region45: #{tpu_custom_call.1} parent=27 // pred_check
          %p506 = pneg %p115
        $region46: #{tpu_custom_call.1} parent=27 // pred_check_branch
          %508 = sbr.rel (%p506) target = $region48
        $region47: #{tpu_custom_call.1} parent=27 // pred_region
          %s509 = smul.u32 4, %s25
          %s510 = smul.u32 3, %s26
          %s512 = ssub.s32 1536, 1536
          %513 = vsyncadd %s502, %s512
          %s514 = smul.addr %s509, 6
          %s515 = sadd.s32 %s510, %s514
          %s516 = smul.addr %s515, 128
          %s517 = scalar_lea.hbm %s2, %s516
          %s518 = sshll.u32 %s505, 4
          %s519 = int_to_ptr.vmem [resolvable:$true] %s518
          %524 = dma.vmem_to_hbm [thread:$0]  %s519, 1536, %s517, %s502, 384, 768, 24
        $region48: #{tpu_custom_call.1} parent=27 // pred_fallthru
          _
      $region28: #{tpu_custom_call.1} parent=5 // pred_fallthru
        _
      %p525 = scmp.le.s32.totalorder 2, %s15
      // Predicated region
      $region49: #{tpu_custom_call.1} parent=5 // pred_check
        %p526 = pneg %p525
      $region50: #{tpu_custom_call.1} parent=5 // pred_check_branch
        %528 = sbr.rel (%p526) target = $region52
      $region51: #{tpu_custom_call.1} parent=5 // pred_region
        %s529 = ssub.s32 %s15, 2
        // Predicated region
        $region53: #{tpu_custom_call.1} parent=51 // pred_check
          %p530 = pneg %p121
        $region54: #{tpu_custom_call.1} parent=51 // pred_check_branch
          %532 = sbr.rel (%p530) target = $region56
        $region55: #{tpu_custom_call.1} parent=51 // pred_region
          %s533 = sand.u32 %s106, 1
          %s534 = scalar_lea.sflag [#allocation5], %s533
          %s535 = sand.u32 %s106, 1
          %s536 = smul.addr %s535, 96
          %s537 = scalar_lea.vmem [#allocation8], %s536
          %538 = dma.done %s534, 1536
        $region56: #{tpu_custom_call.1} parent=51 // pred_fallthru
          _
      $region52: #{tpu_custom_call.1} parent=5 // pred_fallthru
        _
    $region6: #{tpu_custom_call.1} parent=1 // loop_footer
      %s19 = sadd.s32 1, %s15
    $region7: #{tpu_custom_call.1} parent=1 // loop_footer_branch
      %14 = sbr.rel target = $region3
    $region8: #{tpu_custom_call.1} parent=1 // loop_exit
      _
    %539 = vsyncpa [#allocation4], 1
    %s540 = scalar_lea.sflag [#allocation4], 1
    %541 = vsyncpa %s540, 1
    %542 = vsyncpa [#allocation7], 1
    %s543 = scalar_lea.sflag [#allocation7], 1
    %544 = vsyncpa %s543, 1
    %545 = vsyncpa [#allocation5], 1
    %s546 = scalar_lea.sflag [#allocation5], 1
    %547 = vsyncpa %s546, 1

</llo_original>
